<compile_context>
chip_gen: v7x
topology: tpu7x:2x2x1
jax: 0.10.0
libtpu: 0.0.40
codegen_flags: <defaults>
</compile_context>

<pallas_src>
import jax
import jax.numpy as jnp
from jax import lax
from jax.experimental import pallas as pl
from jax.experimental.pallas import tpu as pltpu

LANE = 128
MIN_TILE_ROWS = 512     # >= 512-row tiles reach ~85% of HBM roofline
SMALL_ROWS = 1024       # below this: single full-array block, no tiling
MIN_K_STEPS = 4         # force a few steps so the DMA pipeline overlaps


def _cdiv(a, b):
    return (a + b - 1) // b


def _round_up(a, b):
    return _cdiv(a, b) * b


def _detect_num_tensorcores():
    """2 for v7x-class devices (2 TensorCores/chip), else 1 (v5e/v6e)."""
    try:
        kind = jax.devices()[0].device_kind.lower()
    except Exception:
        return 1
    return 2 if ("v7" in kind or "7x" in kind) else 1


def _make_l2_kernel(tm, k_steps, numel, needs_mask, acc_sub):
    full_rows = numel // LANE
    rem = numel % LANE

    def kernel(x_ref, t_ref, out_ref, acc_ref):
        c = pl.program_id(0)
        k = pl.program_id(1)

        @pl.when(k == 0)
        def _init():
            acc_ref[...] = jnp.zeros_like(acc_ref)

        x = x_ref[...].astype(jnp.float32)
        t = t_ref[...].astype(jnp.float32)
        # sigmoid(x) = 0.5 * (tanh(x/2) + 1): one EUP transcendental / element.
        rec = 0.5 * (jnp.tanh(0.5 * x) + 1.0)
        d = t - rec
        sq = d * d

        if needs_mask:
            # Zero the contribution of rows/lanes past the valid element
            # count (covers both the partial last row-block and the <128-elem
            # lane pad).  jnp.where selects, so garbage (even NaN) in the
            # out-of-bounds region cannot leak into the sum.
            row0 = (c * k_steps + k) * tm
            row_idx = row0 + lax.broadcasted_iota(jnp.int32, (tm, LANE), 0)
            if rem == 0:
                valid = row_idx < full_rows
            else:
                lane_idx = lax.broadcasted_iota(jnp.int32, (tm, LANE), 1)
                valid = (row_idx < full_rows) | (
                    (row_idx == full_rows) & (lane_idx < rem))
            sq = jnp.where(valid, sq, 0.0)

        if acc_sub > 1:
            # Reduce only along the sublane-block axis (pure VPU vreg adds);
            # keep a resident (8, 128) f32 accumulator.
            acc_ref[...] += sq.reshape(tm // acc_sub, acc_sub, LANE).sum(axis=0)
        else:
            acc_ref[...] += sq.sum(axis=0, keepdims=True)

        @pl.when(k == k_steps - 1)
        def _finalize():
            if acc_sub > 1:
                out_ref[...] = acc_ref[...].sum(axis=0, keepdims=True)
            else:
                out_ref[...] = acc_ref[...]

    return kernel


def l2_loss(logits, target, size_average=True, block_bytes=4 << 20,
            num_splits=None):
    """Pallas implementation of L2Loss.forward. Returns a float32 scalar."""
    assert logits.shape == target.shape, (logits.shape, target.shape)
    numel = int(target.size)
    if numel == 0:
        return jnp.float32(0.0)

    if num_splits is None:
        num_splits = _detect_num_tensorcores()

    x = logits.reshape(-1)
    t = target.reshape(-1)

    # Lane alignment.  If numel is a multiple of 128 (the common case) the
    # reshape below is a free bitcast — no extra HBM traffic.  Otherwise pad
    # with < 128 zeros so the 2-D reshape exists; padded positions are masked
    # to zero contribution inside the kernel (so the pad value is irrelevant).
    rem = numel % LANE
    rows_total = _cdiv(numel, LANE)
    if rem:
        pad = LANE - rem
        x = jnp.pad(x, (0, pad))
        t = jnp.pad(t, (0, pad))
    x2 = x.reshape(rows_total, LANE)
    t2 = t.reshape(rows_total, LANE)

    # dtype-aware tile geometry: ~block_bytes per input block, tile rows
    # rounded to the packed dtype's native sublane tile (8/16/32 for 4/2/1 B).
    item_x = jnp.dtype(x2.dtype).itemsize
    item_t = jnp.dtype(t2.dtype).itemsize
    sub = max(8, 32 // min(item_x, item_t))
    block_rows = max(sub,
                     (block_bytes // (LANE * max(item_x, item_t))) // sub * sub)

    if rows_total <= SMALL_ROWS:
        # Tiny input: one full-array block (full-dim blocks are always
        # layout-legal), no splitting, no extra steps.
        num_splits_eff, k_steps, tm = 1, 1, rows_total
    else:
        num_splits_eff = max(1, min(int(num_splits), 2))
        rows_per_split = _cdiv(rows_total, num_splits_eff)
        k_steps = _cdiv(rows_per_split, block_rows)
        if k_steps < MIN_K_STEPS:
            # Force a few steps (tiles >= MIN_TILE_ROWS) so the double-buffer
            # pipeline actually overlaps DMA with compute.
            k_steps = max(1, min(MIN_K_STEPS, rows_per_split // MIN_TILE_ROWS))
        tm = _round_up(_cdiv(rows_per_split, k_steps), sub)
        k_steps = _cdiv(rows_per_split, tm)

    covered_rows = num_splits_eff * k_steps * tm
    needs_mask = (rem != 0) or (covered_rows > rows_total)
    acc_sub = 8 if tm % 8 == 0 else 1

    kernel = _make_l2_kernel(tm, k_steps, numel, needs_mask, acc_sub)

    in_map = lambda c, k: (c * k_steps + k, 0)

    arb = getattr(pltpu, "ARBITRARY", "arbitrary")
    if num_splits_eff > 1:
        # Only v7x-class chips reach here; CORE_PARALLEL actually shards the
        # leading grid axis across the two TensorCores.
        lead = getattr(pltpu, "CORE_PARALLEL", None)
        if lead is None:
            lead = getattr(pltpu, "PARALLEL", "parallel")
    else:
        lead = arb

    partials = pl.pallas_call(
        kernel,
        out_shape=jax.ShapeDtypeStruct((num_splits_eff, LANE), jnp.float32),
        grid_spec=pltpu.PrefetchScalarGridSpec(
            num_scalar_prefetch=0,
            grid=(num_splits_eff, k_steps),
            in_specs=[pl.BlockSpec((tm, LANE), in_map),
                      pl.BlockSpec((tm, LANE), in_map)],
            out_specs=pl.BlockSpec((1, LANE), lambda c, k: (c, 0)),
            scratch_shapes=[pltpu.VMEM((acc_sub, LANE), jnp.float32)],
        ),
        compiler_params=pltpu.CompilerParams(
            dimension_semantics=(lead, arb),
            vmem_limit_bytes=32 << 20,
        ),
        cost_estimate=pl.CostEstimate(
            flops=6 * numel,
            transcendentals=numel,
            bytes_accessed=int(x2.size) * item_x + int(t2.size) * item_t
                           + num_splits_eff * LANE * 4,
        ),
    )(x2, t2)

    # Tiny scalar epilogue in XLA: combine per-core partials, sqrt, scale.
    loss = jnp.sqrt(jnp.sum(partials))
    if size_average:
        loss = loss / jnp.float32(numel)
    return loss


def _reference(logits, target, size_average=True):
    rec = jax.nn.sigmoid(logits.astype(jnp.float32))
    loss = jnp.sqrt(jnp.sum((target.astype(jnp.float32) - rec) ** 2))
    if size_average:
        loss = loss / target.size
    return loss


if __name__ == "__main__":
    key = jax.random.PRNGKey(0)
    k1, k2, k3, k4, k5, k6 = jax.random.split(key, 6)

    # Small NCHW shapes: batch=2, channels=4, spatial=16x16 (lane-aligned).
    logits = jax.random.normal(k1, (2, 4, 16, 16), dtype=jnp.float32)
    target = jax.random.uniform(k2, (2, 4, 16, 16), dtype=jnp.float32)

    loss = l2_loss(logits, target, size_average=True)
    jax.block_until_ready(loss)
    ref = _reference(logits, target, size_average=True)
    assert jnp.allclose(loss, ref, rtol=1e-5, atol=1e-7), (loss, ref)

    # size_average=False path.
    loss_sum = l2_loss(logits, target, size_average=False)
    jax.block_until_ready(loss_sum)
    ref_sum = _reference(logits, target, size_average=False)
    assert jnp.allclose(loss_sum, ref_sum, rtol=1e-5, atol=1e-5), (loss_sum, ref_sum)

    # Awkward (numel % 128 != 0) shape exercises the lane-pad + mask path.
    logits_odd = jax.random.normal(k3, (3, 5, 7, 11), dtype=jnp.float32)
    target_odd = jax.random.uniform(k4, (3, 5, 7, 11), dtype=jnp.float32)
    loss_odd = l2_loss(logits_odd, target_odd, size_average=True)
    jax.block_until_ready(loss_odd)
    ref_odd = _reference(logits_odd, target_odd, size_average=True)
    assert jnp.allclose(loss_odd, ref_odd, rtol=1e-5, atol=1e-7), (loss_odd, ref_odd)

    # bf16 inputs: streamed in native dtype, cast to f32 in-register.
    loss_bf16 = l2_loss(logits.astype(jnp.bfloat16), target.astype(jnp.bfloat16))
    jax.block_until_ready(loss_bf16)
    ref_bf16 = _reference(logits.astype(jnp.bfloat16), target.astype(jnp.bfloat16))
    assert jnp.allclose(loss_bf16, ref_bf16, rtol=1e-5, atol=1e-6), (loss_bf16, ref_bf16)

    # Larger lane-aligned shape exercises the tiled path + in-kernel row mask
    # (no wrapper-side padding or copies).
    logits_big = jax.random.normal(k5, (2, 4, 250, 200), dtype=jnp.float32)
    target_big = jax.random.uniform(k6, (2, 4, 250, 200), dtype=jnp.float32)
    loss_big = l2_loss(logits_big, target_big, size_average=True)
    jax.block_until_ready(loss_big)
    ref_big = _reference(logits_big, target_big, size_average=True)
    assert jnp.allclose(loss_big, ref_big, rtol=1e-4), (loss_big, ref_big)

    print("KERNEL_OK")
</pallas_src>

<mosaic_0001>
module attributes {stable_mosaic.version = 11 : i64} {
  func.func @kernel(%arg0: i32, %arg1: i32, %arg2: memref<16x128xf32, #tpu.memory_space<vmem>>, %arg3: memref<16x128xf32, #tpu.memory_space<vmem>>, %arg4: memref<1x128xf32, #tpu.memory_space<vmem>>, %arg5: memref<8x128xf32, #tpu.memory_space<vmem>>) attributes {dimension_semantics = [#tpu.dimension_semantics<arbitrary>, #tpu.dimension_semantics<arbitrary>], iteration_bounds = array<i64: 1, 1>, scalar_prefetch = 0 : i64, scratch_operands = 1 : i64, tpu.core_type = #tpu.core_type<tc>, window_params = [{transform_indices = @transform_0, window_bounds = array<i64: 16, 128>}, {transform_indices = @transform_1, window_bounds = array<i64: 16, 128>}, {transform_indices = @transform_2, window_bounds = array<i64: 1, 128>}]} {
    %c0_i32 = arith.constant 0 : i32
    %0 = arith.cmpi eq, %arg1, %c0_i32 : i32
    %1 = arith.extui %0 : i1 to i32
    %c0_i32_0 = arith.constant 0 : i32
    %2 = arith.cmpi ne, %1, %c0_i32_0 : i32
    scf.if %2 {
      %cst_13 = arith.constant 0.000000e+00 : f32
      %22 = vector.broadcast %cst_13 : f32 to vector<8x128xf32>
      %c0_14 = arith.constant 0 : index
      %c0_15 = arith.constant 0 : index
      %23 = vector.load %arg5[%c0_14, %c0_15] : memref<8x128xf32, #tpu.memory_space<vmem>>, vector<8x128xf32>
      tpu.vector_store %arg5[%c0_14, %c0_15], %22 {strides = array<i32>} : memref<8x128xf32, #tpu.memory_space<vmem>>, vector<8x128xf32>,
    } else {
    }
    %c0 = arith.constant 0 : index
    %c0_1 = arith.constant 0 : index
    %3 = vector.load %arg2[%c0, %c0_1] : memref<16x128xf32, #tpu.memory_space<vmem>>, vector<16x128xf32>
    %c0_2 = arith.constant 0 : index
    %c0_3 = arith.constant 0 : index
    %4 = vector.load %arg3[%c0_2, %c0_3] : memref<16x128xf32, #tpu.memory_space<vmem>>, vector<16x128xf32>
    %cst = arith.constant 5.000000e-01 : f32
    %5 = vector.broadcast %cst : f32 to vector<16x128xf32>
    %6 = arith.mulf %5, %3 : vector<16x128xf32>
    %7 = math.tanh %6 : vector<16x128xf32>
    %cst_4 = arith.constant 1.000000e+00 : f32
    %8 = vector.broadcast %cst_4 : f32 to vector<16x128xf32>
    %9 = arith.addf %7, %8 : vector<16x128xf32>
    %cst_5 = arith.constant 5.000000e-01 : f32
    %10 = vector.broadcast %cst_5 : f32 to vector<16x128xf32>
    %11 = arith.mulf %10, %9 : vector<16x128xf32>
    %12 = arith.subf %4, %11 : vector<16x128xf32>
    %13 = arith.mulf %12, %12 : vector<16x128xf32>
    %c0_6 = arith.constant 0 : index
    %c0_7 = arith.constant 0 : index
    %14 = vector.load %arg5[%c0_6, %c0_7] : memref<8x128xf32, #tpu.memory_space<vmem>>, vector<8x128xf32>
    %15 = vector.shape_cast %13 : vector<16x128xf32> to vector<2x8x128xf32>
    %cst_8 = arith.constant dense<0.000000e+00> : vector<8x128xf32>
    %16 = vector.multi_reduction <add>, %15, %cst_8 [0] : vector<2x8x128xf32> to vector<8x128xf32>
    %17 = arith.addf %14, %16 : vector<8x128xf32>
    %c0_9 = arith.constant 0 : index
    %c0_10 = arith.constant 0 : index
    %18 = vector.load %arg5[%c0_9, %c0_10] : memref<8x128xf32, #tpu.memory_space<vmem>>, vector<8x128xf32>
    tpu.vector_store %arg5[%c0_9, %c0_10], %17 {strides = array<i32>} : memref<8x128xf32, #tpu.memory_space<vmem>>, vector<8x128xf32>,
    %c0_i32_11 = arith.constant 0 : i32
    %19 = arith.cmpi eq, %arg1, %c0_i32_11 : i32
    %20 = arith.extui %19 : i1 to i32
    %c0_i32_12 = arith.constant 0 : i32
    %21 = arith.cmpi ne, %20, %c0_i32_12 : i32
    scf.if %21 {
      %c0_13 = arith.constant 0 : index
      %c0_14 = arith.constant 0 : index
      %22 = vector.load %arg5[%c0_13, %c0_14] : memref<8x128xf32, #tpu.memory_space<vmem>>, vector<8x128xf32>
      %cst_15 = arith.constant dense<0.000000e+00> : vector<128xf32>
      %23 = vector.multi_reduction <add>, %22, %cst_15 [0] : vector<8x128xf32> to vector<128xf32>
      %24 = vector.shape_cast %23 : vector<128xf32> to vector<1x128xf32>
      %c0_16 = arith.constant 0 : index
      %c0_17 = arith.constant 0 : index
      %25 = vector.load %arg4[%c0_16, %c0_17] : memref<1x128xf32, #tpu.memory_space<vmem>>, vector<1x128xf32>
      tpu.vector_store %arg4[%c0_16, %c0_17], %24 {strides = array<i32>} : memref<1x128xf32, #tpu.memory_space<vmem>>, vector<1x128xf32>,
    } else {
    }
    return
  }
  func.func @transform_0(%arg0: i32, %arg1: i32) -> (i32, i32) {
    %c1_i32 = arith.constant 1 : i32
    %0 = arith.muli %arg0, %c1_i32 : i32
    %1 = arith.addi %0, %arg1 : i32
    %c0_i32 = arith.constant 0 : i32
    %c0_i32_0 = arith.constant 0 : i32
    return %1, %c0_i32 : i32, i32
  }
  func.func @transform_1(%arg0: i32, %arg1: i32) -> (i32, i32) {
    %c1_i32 = arith.constant 1 : i32
    %0 = arith.muli %arg0, %c1_i32 : i32
    %1 = arith.addi %0, %arg1 : i32
    %c0_i32 = arith.constant 0 : i32
    %c0_i32_0 = arith.constant 0 : i32
    return %1, %c0_i32 : i32, i32
  }
  func.func @transform_2(%arg0: i32, %arg1: i32) -> (i32, i32) {
    %c0_i32 = arith.constant 0 : i32
    %c0_i32_0 = arith.constant 0 : i32
    return %arg0, %c0_i32 : i32, i32
  }
}

</mosaic_0001>

<llo_original>
// kernel: tpu_custom_call.1
$region0: #{tpu_custom_call.1}
  #allocation0 [shape = 'u32[]', space=smem, size = 0x4, offset = 0x4, fixed_abs, tag = 'smem constant byte address 0x4 - core index']
  #allocation1 [shape = 'u32[144,128]{1,0:T(1,128)}', space=vmem, size = 0x12000, scoped, tag = 'internal scratch']
  #allocation2 [shape = 'f32[8,128]{1,0:T(8,128)}', space=vmem, size = 0x1000, scoped, tag = 'scratch operand']
  %s0 = inlined_call_operand.hbm [shape: f32[16,128], index: 0, kind: input, shape index: {}]
  %s1 = inlined_call_operand.hbm [shape: f32[16,128], index: 1, kind: input, shape index: {}]
  %s2 = inlined_call_operand.hbm [shape: f32[1,128], index: 2, kind: output, shape index: {}]
  %s3 = sld [smem:[#allocation0]]
  $region34: #{tpu_custom_call.1} parent=0
    _
  %s5 = ssub.s32 1, %s3
  %s6 = scalar_select 0, %s5, %s3
  $region1: #{tpu_custom_call.1} parent=0
    #allocation3 [shape = 'u8[8192]{0}', space=vmem, size = 0x2000, scoped, tag = 'input window, operand 0, single buffered']
    #allocation4 [shape = 's32[1]{0}', space=sflag, size = 0x4, scoped, tag = 'scoped memory for tpu_custom_call.1']
    #allocation5 [shape = 's32[1]{0}', space=sflag, size = 0x4, scoped, tag = 'scoped memory for tpu_custom_call.1']
    #allocation6 [shape = 'u8[8192]{0}', space=vmem, size = 0x2000, scoped, tag = 'input window, operand 1, single buffered']
    #allocation7 [shape = 's32[1]{0}', space=sflag, size = 0x4, scoped, tag = 'scoped memory for tpu_custom_call.1']
    #allocation8 [shape = 'u8[512]{0}', space=vmem, size = 0x400, scoped, tag = 'output window, operand 0, single buffered']
    %7 = vsyncpa [#allocation4], 0
    %8 = vsyncpa [#allocation7], 0
    %9 = vsyncpa [#allocation5], 0
    // Predicated region
    $region2: #{tpu_custom_call.1} parent=1 // pred_check
      _
    $region3: #{tpu_custom_call.1} parent=1 // pred_check_branch
      %11 = sbr.rel (0) target = $region5
    $region4: #{tpu_custom_call.1} parent=1 // pred_region
      %s12 = sadd.s32 0, 0
      %s13 = smul.u32 2, %s12
      %s15 = ssub.s32 256, 256
      %16 = vsyncadd [#allocation4], %s15
      %s17 = smul.addr %s13, 128
      %s18 = scalar_lea.hbm %s0, %s17
      %s19 = sshll.u32 [#allocation3], 4
      %s20 = int_to_ptr.vmem [resolvable:$true] %s19
      %25 = dma.hbm_to_vmem [thread:$0]  %s18, 256, %s20, [#allocation4], 128, 128, 8
    $region5: #{tpu_custom_call.1} parent=1 // pred_fallthru
      _
    // Predicated region
    $region6: #{tpu_custom_call.1} parent=1 // pred_check
      _
    $region7: #{tpu_custom_call.1} parent=1 // pred_check_branch
      %27 = sbr.rel (0) target = $region9
    $region8: #{tpu_custom_call.1} parent=1 // pred_region
      %s28 = sadd.s32 0, 0
      %s29 = smul.u32 2, %s28
      %s31 = ssub.s32 256, 256
      %32 = vsyncadd [#allocation7], %s31
      %s33 = smul.addr %s29, 128
      %s34 = scalar_lea.hbm %s1, %s33
      %s35 = sshll.u32 [#allocation6], 4
      %s36 = int_to_ptr.vmem [resolvable:$true] %s35
      %41 = dma.hbm_to_vmem [thread:$0]  %s34, 256, %s36, [#allocation7], 128, 128, 8
    $region9: #{tpu_custom_call.1} parent=1 // pred_fallthru
      _
    // Predicated region
    $region10: #{tpu_custom_call.1} parent=1 // pred_check
      _
    $region11: #{tpu_custom_call.1} parent=1 // pred_check_branch
      %43 = sbr.rel (0) target = $region13
    $region12: #{tpu_custom_call.1} parent=1 // pred_region
      %44 = dma.done [#allocation4], 256
    $region13: #{tpu_custom_call.1} parent=1 // pred_fallthru
      _
    // Predicated region
    $region14: #{tpu_custom_call.1} parent=1 // pred_check
      _
    $region15: #{tpu_custom_call.1} parent=1 // pred_check_branch
      %46 = sbr.rel (0) target = $region17
    $region16: #{tpu_custom_call.1} parent=1 // pred_region
      %47 = dma.done [#allocation7], 256
    $region17: #{tpu_custom_call.1} parent=1 // pred_fallthru
      _
    %s48 = sadd.s32 0, 0
    %s49 = smul.u32 2, %s48
    %s50 = sadd.s32 0, 0
    %s51 = smul.u32 2, %s50
    %p52 = scmp.eq.s32.totalorder 0, 0
    // Predicated region
    $region18: #{tpu_custom_call.1} parent=1 // pred_check
      %p53 = pneg %p52
    $region19: #{tpu_custom_call.1} parent=1 // pred_check_branch
      %55 = sbr.rel (%p53) target = $region21
    $region20: #{tpu_custom_call.1} parent=1 // pred_region
      %56 = vst [vmem:[#allocation2] sm:$0xff] 0.0
    $region21: #{tpu_custom_call.1} parent=1 // pred_fallthru
      _
    %v57 = vld [vmem:[#allocation3] sm:$0xff]
    %v58 = vld [vmem:[#allocation3 + $0x8] sm:$0xff]
    %v59 = vld [vmem:[#allocation6] sm:$0xff]
    %v60 = vld [vmem:[#allocation6 + $0x8] sm:$0xff]
    %v61 = vmul.f32 %v57, 0.5
    %v62 = vmul.f32 %v58, 0.5
    %v63 = vtanh.pop %v61
    %v64 = vtanh.pop %v62
    %v65 = vadd.f32 %v63, 1.0
    %v66 = vadd.f32 %v64, 1.0
    %v67 = vmul.f32 %v65, 0.5
    %v68 = vmul.f32 %v66, 0.5
    %v69 = vsub.f32 %v59, %v67
    %v70 = vsub.f32 %v60, %v68
    %v71 = vmul.f32 %v69, %v69
    %v72 = vmul.f32 %v70, %v70
    %v73 = vld [vmem:[#allocation2] sm:$0xff]
    %v74 = vadd.f32 %v71, %v72
    %v75 = vadd.f32 %v73, %v74
    %76 = vst [vmem:[#allocation2] sm:$0xff] %v75
    // Predicated region
    $region22: #{tpu_custom_call.1} parent=1 // pred_check
      %p77 = pneg %p52
    $region23: #{tpu_custom_call.1} parent=1 // pred_check_branch
      %79 = sbr.rel (%p77) target = $region25
    $region24: #{tpu_custom_call.1} parent=1 // pred_region
      %v80 = vld [vmem:[#allocation2] sm:$0xff]
      %v81 = vrot.slane %v80, 4
      %v82 = vadd.f32 %v80, %v81
      %v83 = vrot.slane %v82, 2
      %v84 = vadd.f32 %v82, %v83
      %v85 = vrot.slane %v84, 1
      %v86 = vadd.f32 %v84, %v85
      %87 = vst [vmem:[#allocation8] sm:$0x1] %v86
    $region25: #{tpu_custom_call.1} parent=1 // pred_fallthru
      _
    // Predicated region
    $region26: #{tpu_custom_call.1} parent=1 // pred_check
      _
    $region27: #{tpu_custom_call.1} parent=1 // pred_check_branch
      %89 = sbr.rel (0) target = $region29
    $region28: #{tpu_custom_call.1} parent=1 // pred_region
      %s91 = ssub.s32 16, 16
      %92 = vsyncadd [#allocation5], %s91
      %s94 = sshll.u32 [#allocation8], 4
      %s95 = int_to_ptr.vmem [resolvable:$true] %s94
      %97 = dma.vmem_to_hbm [thread:$0]  %s95, 16, %s2, [#allocation5]
    $region29: #{tpu_custom_call.1} parent=1 // pred_fallthru
      _
    // Predicated region
    $region30: #{tpu_custom_call.1} parent=1 // pred_check
      _
    $region31: #{tpu_custom_call.1} parent=1 // pred_check_branch
      %99 = sbr.rel (0) target = $region33
    $region32: #{tpu_custom_call.1} parent=1 // pred_region
      %100 = dma.done [#allocation5], 16
    $region33: #{tpu_custom_call.1} parent=1 // pred_fallthru
      _
    %101 = vsyncpa [#allocation4], 1
    %102 = vsyncpa [#allocation7], 1
    %103 = vsyncpa [#allocation5], 1

</llo_original>
